<compile_context>
chip_gen: v7x
topology: tpu7x:2x2x1
jax: 0.10.0
libtpu: 0.0.40
codegen_flags: <defaults>
</compile_context>

<pallas_src>
import functools

import jax
import jax.numpy as jnp
from jax.experimental import pallas as pl
from jax.experimental.pallas import tpu as pltpu


def _round_up(a, m):
    return ((a + m - 1) // m) * m


def _pool_sum_kernel(x_ref, o_ref, *, hw, thw):
    """Accumulate spatial (lane-axis) sums of x rows into the f32 output block."""
    k = pl.program_id(1)
    nk = pl.num_programs(1)

    @pl.when(k == 0)
    def _init():
        o_ref[...] = jnp.zeros_like(o_ref)

    if hw % thw == 0:
        # Every spatial tile is full: bare accumulate, no per-vreg mask work.
        o_ref[...] += jnp.sum(x_ref[...], axis=-1, keepdims=True, dtype=jnp.float32)
    else:
        @pl.when(k < nk - 1)
        def _full_tile():
            o_ref[...] += jnp.sum(x_ref[...], axis=-1, keepdims=True,
                                  dtype=jnp.float32)

        @pl.when(k == nk - 1)
        def _ragged_tile():
            # Only the last (ragged) tile pays iota + compare + select.
            x = x_ref[...]
            lane = jax.lax.broadcasted_iota(jnp.int32, x.shape, dimension=1)
            valid = hw - k * thw
            x = jnp.where(lane < valid, x, jnp.zeros_like(x))
            o_ref[...] += jnp.sum(x, axis=-1, keepdims=True, dtype=jnp.float32)


def _fc_sigmoid_kernel(p_ref, w_ref, b_ref, o_ref):
    # p: (B, C) f32 spatial sums; w: (C, E) f32 pre-scaled by 1/(H*W); b: (1, E).
    logits = jnp.dot(p_ref[...], w_ref[...],
                     preferred_element_type=jnp.float32) + b_ref[...]
    o_ref[...] = jax.nn.sigmoid(logits)


def routing_func(x, w, b, *, x_block_bytes=None, vmem_limit_bytes=None):
    """x: (B, C, H, W) NCHW; w: (E, C, 1, 1) 1x1-conv weight; b: (E,) bias.

    Returns sigmoid(mean_{H,W}(x) @ W^T + b) as float32 (B, E), matching the
    PyTorch module.
    """
    B, C, H, W = x.shape
    E = w.shape[0]
    HW = H * W
    R = B * C

    itemsize = jnp.dtype(x.dtype).itemsize
    sublane_mult = 8 * (4 // itemsize)          # f32: 8, bf16: 16, int8/fp8: 32
    hw_pad = _round_up(HW, 128)                 # lane padding of a full row

    # --- generation-aware VMEM budget ----------------------------------------
    try:
        info = pltpu.get_tpu_info()
        vmem_cap = int(getattr(info, "vmem_capacity_bytes", 0)) or (64 << 20)
    except Exception:
        vmem_cap = 64 << 20                     # conservative (v7x per-TC)
    if vmem_limit_bytes is None:
        vmem_limit_bytes = min(vmem_cap // 2, 64 << 20)   # 64 MiB v5e/v6e, 32 MiB v7x
    if x_block_bytes is None:
        # x is double-buffered by Pallas; leave ~1/3 headroom for output/metadata.
        x_block_bytes = vmem_limit_bytes // 3

    # --- tile selection: prefer a full-extent spatial block --------------------
    if _round_up(R, sublane_mult) * hw_pad * itemsize <= x_block_bytes:
        TR, THW = R, HW                                   # one (or few) big blocks
    else:
        rows_fit = (x_block_bytes // (hw_pad * itemsize)) // sublane_mult * sublane_mult
        if rows_fit >= sublane_mult:
            TR, THW = rows_fit, HW                        # tile rows, full HW
        else:
            # A single padded row slab is too big: tile the spatial axis.
            TR = R if R < sublane_mult else sublane_mult
            tr_pad = _round_up(TR, sublane_mult)
            max_lanes = (x_block_bytes // (tr_pad * itemsize)) // 128 * 128
            THW = max(max_lanes, 512)                     # keep strided rows >= ~2 KiB
            THW = min(THW, (HW // 128) * 128)
            if THW < 128:
                THW = HW                                  # HW < 128: single block

    # v7x megacore: keep >= 2 blocks on the parallel (row) axis when possible.
    if R >= 2 * sublane_mult:
        TR = min(TR, _round_up((R + 1) // 2, sublane_mult))

    grid = (pl.cdiv(R, TR), pl.cdiv(HW, THW))             # (rows, spatial-reduce)

    x2d = x.reshape(R, HW)                                # free contiguous reshape

    pool_cost = pl.CostEstimate(
        flops=R * HW,                                     # 1 add per element
        transcendentals=0,
        bytes_accessed=R * HW * itemsize + R * 4,
    )

    # NOTE: if R % TR != 0, the last row block reads Pallas boundary padding;
    # those rows' sums are garbage but are dropped on write-back (never used).
    pooled_sum = pl.pallas_call(
        functools.partial(_pool_sum_kernel, hw=HW, thw=THW),
        out_shape=jax.ShapeDtypeStruct((R, 1), jnp.float32),
        grid=grid,
        in_specs=[pl.BlockSpec((TR, THW), lambda i, k: (i, k))],
        out_specs=pl.BlockSpec((TR, 1), lambda i, k: (i, 0)),
        compiler_params=pltpu.CompilerParams(
            dimension_semantics=("parallel", "arbitrary"),
            vmem_limit_bytes=vmem_limit_bytes,
        ),
        cost_estimate=pool_cost,
    )(x2d)

    pooled = pooled_sum.reshape(B, C)                     # f32 spatial sums

    # Fold the mean's 1/(H*W) into the tiny FC weight (host-side, free).
    w2d = (w.reshape(E, C).T.astype(jnp.float32)) / float(HW)   # (C, E)
    b2d = b.reshape(1, E).astype(jnp.float32)

    out = pl.pallas_call(
        _fc_sigmoid_kernel,
        out_shape=jax.ShapeDtypeStruct((B, E), jnp.float32),
        grid=(1,),
        in_specs=[
            pl.BlockSpec((B, C), lambda i: (0, 0)),
            pl.BlockSpec((C, E), lambda i: (0, 0)),
            pl.BlockSpec((1, E), lambda i: (0, 0)),
        ],
        out_specs=pl.BlockSpec((B, E), lambda i: (0, 0)),
    )(pooled, w2d, b2d)
    return out


def routing_func_ref(x, w, b):
    """Pure-JAX reference mirroring the PyTorch module (eval mode)."""
    pooled = jnp.mean(x.astype(jnp.float32), axis=(2, 3))                 # (B, C)
    logits = pooled @ w.reshape(w.shape[0], -1).T.astype(jnp.float32) + b.astype(jnp.float32)
    return jax.nn.sigmoid(logits)


if __name__ == "__main__":
    key = jax.random.PRNGKey(0)
    k_x, k_w, k_b, k_x2, k_w2, k_b2 = jax.random.split(key, 6)

    # Case 1: small module-consistent shapes (single full-extent spatial block).
    B, C, H, W, E = 2, 4, 16, 16, 8
    x = jax.random.normal(k_x, (B, C, H, W), dtype=jnp.float32)
    w = jax.random.normal(k_w, (E, C, 1, 1), dtype=jnp.float32) * 0.1
    b = jax.random.normal(k_b, (E,), dtype=jnp.float32) * 0.1
    out = jax.block_until_ready(routing_func(x, w, b))
    ref = routing_func_ref(x, w, b)
    assert out.shape == (B, E) and out.dtype == jnp.float32
    assert jnp.allclose(out, ref, atol=1e-5, rtol=1e-5), (out, ref)

    # Case 2: tiny block budget forces spatial tiling with a ragged last tile
    # (exercises pl.when init / bare-accumulate / masked-last-tile paths and
    # multiple parallel row blocks).  HW = 400 -> tiles of 384 + 16 lanes.
    B2, C2, H2, W2, E2 = 4, 8, 20, 20, 6
    x2 = jax.random.normal(k_x2, (B2, C2, H2, W2), dtype=jnp.float32)
    w2 = jax.random.normal(k_w2, (E2, C2, 1, 1), dtype=jnp.float32) * 0.1
    b2 = jax.random.normal(k_b2, (E2,), dtype=jnp.float32) * 0.1
    out2 = jax.block_until_ready(routing_func(x2, w2, b2, x_block_bytes=8 * 128 * 4))
    ref2 = routing_func_ref(x2, w2, b2)
    assert jnp.allclose(out2, ref2, atol=1e-5, rtol=1e-5), (out2, ref2)

    # Case 3: bf16 input streams in bf16 in HBM/VMEM; accumulation and the
    # routing output are float32 (matches the PyTorch module).
    xb = x.astype(jnp.bfloat16)
    outb = jax.block_until_ready(routing_func(xb, w, b))
    refb = routing_func_ref(xb, w, b)
    assert outb.dtype == jnp.float32
    assert jnp.allclose(outb, refb, atol=2e-2, rtol=2e-2), (outb, refb)

    print("KERNEL_OK")
</pallas_src>

<mosaic_0001>
module attributes {stable_mosaic.version = 11 : i64} {
  func.func @_pool_sum_kernel(%arg0: i32, %arg1: i32, %arg2: memref<8x256xf32, #tpu.memory_space<vmem>>, %arg3: memref<8x1xf32, #tpu.memory_space<vmem>>) attributes {dimension_semantics = [#tpu.dimension_semantics<parallel>, #tpu.dimension_semantics<arbitrary>], iteration_bounds = array<i64: 1, 1>, scalar_prefetch = 0 : i64, scratch_operands = 0 : i64, tpu.core_type = #tpu.core_type<tc>, window_params = [{transform_indices = @transform_0, window_bounds = array<i64: 8, 256>}, {transform_indices = @transform_1, window_bounds = array<i64: 8, 1>}]} {
    %c0_i32 = arith.constant 0 : i32
    %0 = arith.cmpi eq, %arg1, %c0_i32 : i32
    %1 = arith.extui %0 : i1 to i32
    %c0_i32_0 = arith.constant 0 : i32
    %2 = arith.cmpi ne, %1, %c0_i32_0 : i32
    scf.if %2 {
      %cst_6 = arith.constant 0.000000e+00 : f32
      %9 = vector.broadcast %cst_6 : f32 to vector<8x1xf32>
      %c0_7 = arith.constant 0 : index
      %c0_8 = arith.constant 0 : index
      %10 = vector.load %arg3[%c0_7, %c0_8] : memref<8x1xf32, #tpu.memory_space<vmem>>, vector<8x1xf32>
      tpu.vector_store %arg3[%c0_7, %c0_8], %9 {strides = array<i32>} : memref<8x1xf32, #tpu.memory_space<vmem>>, vector<8x1xf32>,
    } else {
    }
    %c0 = arith.constant 0 : index
    %c0_1 = arith.constant 0 : index
    %3 = vector.load %arg3[%c0, %c0_1] : memref<8x1xf32, #tpu.memory_space<vmem>>, vector<8x1xf32>
    %c0_2 = arith.constant 0 : index
    %c0_3 = arith.constant 0 : index
    %4 = vector.load %arg2[%c0_2, %c0_3] : memref<8x256xf32, #tpu.memory_space<vmem>>, vector<8x256xf32>
    %cst = arith.constant dense<0.000000e+00> : vector<8xf32>
    %5 = vector.multi_reduction <add>, %4, %cst [1] : vector<8x256xf32> to vector<8xf32>
    %6 = vector.shape_cast %5 : vector<8xf32> to vector<8x1xf32>
    %7 = arith.addf %3, %6 : vector<8x1xf32>
    %c0_4 = arith.constant 0 : index
    %c0_5 = arith.constant 0 : index
    %8 = vector.load %arg3[%c0_4, %c0_5] : memref<8x1xf32, #tpu.memory_space<vmem>>, vector<8x1xf32>
    tpu.vector_store %arg3[%c0_4, %c0_5], %7 {strides = array<i32>} : memref<8x1xf32, #tpu.memory_space<vmem>>, vector<8x1xf32>,
    return
  }
  func.func @transform_0(%arg0: i32, %arg1: i32) -> (i32, i32) {
    %c0_i32 = arith.constant 0 : i32
    return %arg0, %arg1 : i32, i32
  }
  func.func @transform_1(%arg0: i32, %arg1: i32) -> (i32, i32) {
    %c0_i32 = arith.constant 0 : i32
    %c0_i32_0 = arith.constant 0 : i32
    return %arg0, %c0_i32 : i32, i32
  }
}

</mosaic_0001>

<llo_original>
// kernel: tpu_custom_call.1
$region0: #{tpu_custom_call.1}
  #allocation0 [shape = 'u32[]', space=smem, size = 0x4, offset = 0x4, fixed_abs, tag = 'smem constant byte address 0x4 - core index']
  #allocation1 [shape = 'u32[144,128]{1,0:T(1,128)}', space=vmem, size = 0x12000, scoped, tag = 'internal scratch']
  %s0 = inlined_call_operand.hbm [shape: f32[8,256], index: 0, kind: input, shape index: {}]
  %s1 = inlined_call_operand.vmem [shape: f32[8,1], index: 1, kind: output, shape index: {}]
  %s2 = sld [smem:[#allocation0]]
  $region22: #{tpu_custom_call.1} parent=0
    _
  %s4 = ssub.s32 1, %s2
  %s5 = scalar_select 0, %s4, %s2
  $region1: #{tpu_custom_call.1} parent=0
    #allocation2 [shape = 'u8[8192]{0}', space=vmem, size = 0x2000, scoped, tag = 'input window, operand 0, single buffered']
    #allocation3 [shape = 's32[1]{0}', space=sflag, size = 0x4, scoped, tag = 'scoped memory for tpu_custom_call.1']
    %6 = vsyncpa [#allocation3], 0
    // Predicated region
    $region2: #{tpu_custom_call.1} parent=1 // pred_check
      _
    $region3: #{tpu_custom_call.1} parent=1 // pred_check_branch
      %8 = sbr.rel (0) target = $region5
    $region4: #{tpu_custom_call.1} parent=1 // pred_region
      %s10 = ssub.s32 256, 256
      %11 = vsyncadd [#allocation3], %s10
      %s13 = sshll.u32 [#allocation2], 4
      %s14 = int_to_ptr.vmem [resolvable:$true] %s13
      %16 = dma.hbm_to_vmem [thread:$0]  %s0, 256, %s14, [#allocation3]
    $region5: #{tpu_custom_call.1} parent=1 // pred_fallthru
      _
    // Predicated region
    $region6: #{tpu_custom_call.1} parent=1 // pred_check
      _
    $region7: #{tpu_custom_call.1} parent=1 // pred_check_branch
      %18 = sbr.rel (0) target = $region9
    $region8: #{tpu_custom_call.1} parent=1 // pred_region
      %19 = dma.done [#allocation3], 256
    $region9: #{tpu_custom_call.1} parent=1 // pred_fallthru
      _
    %p20 = scmp.eq.s32.totalorder 0, 0
    // Predicated region
    $region10: #{tpu_custom_call.1} parent=1 // pred_check
      %p21 = pneg %p20
    $region11: #{tpu_custom_call.1} parent=1 // pred_check_branch
      %23 = sbr.rel (%p21) target = $region13
    $region12: #{tpu_custom_call.1} parent=1 // pred_region
      %vm24 = vcmask 7168
      %25 = vst.msk [vmem:[%s1] sm:$0xff] %vm24, 0.0
    $region13: #{tpu_custom_call.1} parent=1 // pred_fallthru
      _
    %v26 = vld [vmem:[%s1] sm:$0xff]
    %v27 = vld [vmem:[#allocation2] sm:$0xff]
    %v28 = vld [vmem:[#allocation2 + $0x8] sm:$0xff]
    %v29 = vadd.f32 %v27, %v28
    %30 = vadd.xlane.f32.xlu0 %v29
    %v31 = vpop.xlane.xlu0 %30
    %v32 = vadd.f32 %v26, %v31
    %vm33 = vcmask 7168
    %34 = vst.msk [vmem:[%s1] sm:$0xff] %vm33, %v32
    // Predicated region
    $region14: #{tpu_custom_call.1} parent=1 // pred_check
      _
    $region15: #{tpu_custom_call.1} parent=1 // pred_check_branch
      %36 = sbr.rel (0) target = $region17
    $region16: #{tpu_custom_call.1} parent=1 // pred_region
      _
    $region17: #{tpu_custom_call.1} parent=1 // pred_fallthru
      _
    // Predicated region
    $region18: #{tpu_custom_call.1} parent=1 // pred_check
      _
    $region19: #{tpu_custom_call.1} parent=1 // pred_check_branch
      %38 = sbr.rel (0) target = $region21
    $region20: #{tpu_custom_call.1} parent=1 // pred_region
      _
    $region21: #{tpu_custom_call.1} parent=1 // pred_fallthru
      _
    %39 = vsyncpa [#allocation3], 1

</llo_original>
